<compile_context>
chip_gen: v7x
topology: tpu7x:2x2x1
jax: 0.10.0
libtpu: 0.0.40
codegen_flags: <defaults>
</compile_context>

<pallas_src>
import jax
import jax.numpy as jnp
from jax.experimental import pallas as pl
from jax.experimental.pallas import tpu as pltpu


def _round_up(x, m):
    return (x + m - 1) // m * m


def linear_kernel(x_ref, w_ref, b_ref, o_ref):
    # x_ref: (TM, D) f32 VMEM (batch tile)      w_ref: (1, D) f32 VMEM (resident)
    # b_ref: (1,)    f32 SMEM (scalar bias)     o_ref: (1, TM) f32 VMEM (lane-dense)
    # Contract the feature dim of both operands -> result lands directly in lanes.
    o_ref[...] = (
        jax.lax.dot_general(
            w_ref[...],
            x_ref[...],
            dimension_numbers=(((1,), (1,)), ((), ())),
            preferred_element_type=jnp.float32,
        )
        + b_ref[0]
    )


def _choose_tile_rows(batch, d, *, tile_budget_bytes=8 * 1024 * 1024):
    """Batch rows per tile: multiple of 128, one f32 x-tile <= budget, capped at 2048."""
    rows_fitting = (tile_budget_bytes // (d * 4)) // 128 * 128
    tm = max(128, min(2048, rows_fitting))
    # No point making the tile larger than the lane-padded batch itself.
    tm = min(tm, _round_up(batch, 128))
    return tm
    # TODO(synk): for very large D (x row > ~8 MiB) add a K (feature) grid axis marked
    # "arbitrary" with an f32 VMEM scratch accumulator (@pl.when init/finalize).


def classifier_1L_forward(x, w, b, *, tile_rows=None):
    """Pallas implementation of nn.Linear(input_shape, 1).

    x: (B, D) float32
    w: (1, D) float32  (PyTorch layout: [out_features, in_features])
    b: (1,)   float32
    returns: (B, 1) float32
    """
    B, D = x.shape
    assert w.shape == (1, D) and b.shape == (1,)

    TM = tile_rows if tile_rows is not None else _choose_tile_rows(B, D)
    num_tiles = pl.cdiv(B, TM)
    padded_B = num_tiles * TM

    if padded_B != B:
        # TODO(synk): for large ragged B, mask the edge tile in-kernel instead of
        # padding x (saves one HBM copy of x).
        x = jnp.pad(x, ((0, padded_B - B), (0, 0)))

    out = pl.pallas_call(
        linear_kernel,
        out_shape=jax.ShapeDtypeStruct((1, padded_B), jnp.float32),
        grid=(num_tiles,),
        in_specs=[
            pl.BlockSpec((TM, D), lambda i: (i, 0)),               # x: batch-tiled, pipelined
            pl.BlockSpec((1, D), lambda i: (0, 0)),                # w: fetched once, resident
            pl.BlockSpec(memory_space=pltpu.MemorySpace.SMEM),     # b: scalar in SMEM
        ],
        out_specs=pl.BlockSpec((1, TM), lambda i: (0, i)),         # lane-dense output slab
        compiler_params=pltpu.CompilerParams(
            dimension_semantics=("parallel",),                     # shard batch across TCs on v7x
            vmem_limit_bytes=32 * 1024 * 1024,                     # raise v5e default, headroom on v7x
        ),
    )(x, w, b)

    # Free layout plumbing: lane-dense slab -> (B, 1)
    return out[0, :B].reshape(B, 1)


if __name__ == "__main__":
    key = jax.random.PRNGKey(0)

    # Small shapes consistent with the module: batch=8, input_shape=32.
    B, D = 8, 32
    kx, kw, kb = jax.random.split(key, 3)
    x = jax.random.normal(kx, (B, D), dtype=jnp.float32)

    # PyTorch nn.Linear default init: U(-1/sqrt(D), 1/sqrt(D))
    bound = 1.0 / jnp.sqrt(jnp.float32(D))
    w = jax.random.uniform(kw, (1, D), minval=-bound, maxval=bound, dtype=jnp.float32)
    b = jax.random.uniform(kb, (1,), minval=-bound, maxval=bound, dtype=jnp.float32)

    out = classifier_1L_forward(x, w, b)
    out = jax.block_until_ready(out)
    ref = x @ w.T + b
    assert out.shape == (B, 1), out.shape
    assert jnp.allclose(out, ref, atol=1e-5, rtol=1e-5)

    # Second check: multi-tile grid + ragged batch (forces TM=128 -> 3 grid steps).
    B2, D2 = 300, 64
    kx2, kw2, kb2 = jax.random.split(jax.random.PRNGKey(1), 3)
    x2 = jax.random.normal(kx2, (B2, D2), dtype=jnp.float32)
    bound2 = 1.0 / jnp.sqrt(jnp.float32(D2))
    w2 = jax.random.uniform(kw2, (1, D2), minval=-bound2, maxval=bound2, dtype=jnp.float32)
    b2 = jax.random.uniform(kb2, (1,), minval=-bound2, maxval=bound2, dtype=jnp.float32)

    out2 = classifier_1L_forward(x2, w2, b2, tile_rows=128)
    out2 = jax.block_until_ready(out2)
    ref2 = x2 @ w2.T + b2
    assert out2.shape == (B2, 1), out2.shape
    assert jnp.allclose(out2, ref2, atol=1e-5, rtol=1e-5)

    print("KERNEL_OK")
</pallas_src>

<mosaic_0001>
module attributes {stable_mosaic.version = 11 : i64} {
  func.func @linear_kernel(%arg0: i32, %arg1: memref<128x32xf32, #tpu.memory_space<vmem>>, %arg2: memref<1x32xf32, #tpu.memory_space<vmem>>, %arg3: memref<1xf32, #tpu.memory_space<smem>>, %arg4: memref<1x128xf32, #tpu.memory_space<vmem>>) attributes {dimension_semantics = [#tpu.dimension_semantics<parallel>], iteration_bounds = array<i64: 1>, scalar_prefetch = 0 : i64, scratch_operands = 0 : i64, tpu.core_type = #tpu.core_type<tc>, window_params = [{transform_indices = @transform_0, window_bounds = array<i64: 128, 32>}, {pipeline_mode = #tpu.pipeline_mode<synchronous>, transform_indices = @transform_1, window_bounds = array<i64: 1, 32>}, {transform_indices = @transform_2, window_bounds = array<i64: 1>}, {transform_indices = @transform_3, window_bounds = array<i64: 1, 128>}]} {
    %c0 = arith.constant 0 : index
    %c0_0 = arith.constant 0 : index
    %0 = vector.load %arg2[%c0, %c0_0] : memref<1x32xf32, #tpu.memory_space<vmem>>, vector<1x32xf32>
    %c0_1 = arith.constant 0 : index
    %c0_2 = arith.constant 0 : index
    %1 = vector.load %arg1[%c0_1, %c0_2] : memref<128x32xf32, #tpu.memory_space<vmem>>, vector<128x32xf32>
    %cst = arith.constant dense<0.000000e+00> : vector<1x128xf32>
    %2 = tpu.matmul %0, %1, %cst {dimension_numbers = #tpu.dot_dimension_numbers<[1], [1], [0], [0], [0, 0, 1, 0], [], []>} : vector<1x32xf32>, vector<128x32xf32>, vector<1x128xf32> -> vector<1x128xf32>
    %c0_3 = arith.constant 0 : index
    %3 = memref.load %arg3[%c0_3] : memref<1xf32, #tpu.memory_space<smem>>
    %4 = vector.broadcast %3 : f32 to vector<1x128xf32>
    %5 = arith.addf %2, %4 : vector<1x128xf32>
    %c0_4 = arith.constant 0 : index
    %c0_5 = arith.constant 0 : index
    %6 = vector.load %arg4[%c0_4, %c0_5] : memref<1x128xf32, #tpu.memory_space<vmem>>, vector<1x128xf32>
    tpu.vector_store %arg4[%c0_4, %c0_5], %5 {strides = array<i32>} : memref<1x128xf32, #tpu.memory_space<vmem>>, vector<1x128xf32>,
    return
  }
  func.func @transform_0(%arg0: i32) -> (i32, i32) {
    %c0_i32 = arith.constant 0 : i32
    %c0_i32_0 = arith.constant 0 : i32
    return %arg0, %c0_i32 : i32, i32
  }
  func.func @transform_1(%arg0: i32) -> (i32, i32) {
    %c0_i32 = arith.constant 0 : i32
    %c0_i32_0 = arith.constant 0 : i32
    %c0_i32_1 = arith.constant 0 : i32
    return %c0_i32, %c0_i32_0 : i32, i32
  }
  func.func @transform_2(%arg0: i32) -> i32 {
    %c0_i32 = arith.constant 0 : i32
    %c0_i32_0 = arith.constant 0 : i32
    return %c0_i32 : i32
  }
  func.func @transform_3(%arg0: i32) -> (i32, i32) {
    %c0_i32 = arith.constant 0 : i32
    %c0_i32_0 = arith.constant 0 : i32
    return %c0_i32, %arg0 : i32, i32
  }
}

</mosaic_0001>

<llo_original>
// kernel: tpu_custom_call.1
$region0: #{tpu_custom_call.1}
  #allocation0 [shape = 'u32[]', space=smem, size = 0x4, offset = 0x4, fixed_abs, tag = 'smem constant byte address 0x4 - core index']
  #allocation1 [shape = 'u32[144,128]{1,0:T(1,128)}', space=vmem, size = 0x12000, scoped, tag = 'internal scratch']
  #allocation2 [shape = 'f32[1]{0:T(128)S(6)}', space=smem, size = 0x200, scoped, tag = 'scoped memory for tpu_custom_call.1']
  %s0 = inlined_call_operand.vmem [shape: f32[128,32], index: 0, kind: input, shape index: {}]
  %s1 = inlined_call_operand.vmem [shape: f32[1,32], index: 1, kind: input, shape index: {}]
  %s2 = inlined_call_operand.<no memory space> [shape: f32[1], index: 2, kind: input, shape index: {}]
  %s3 = inlined_call_operand.hbm [shape: f32[1,128], index: 3, kind: output, shape index: {}]
  %s4 = sld [smem:[#allocation0]]
  $region22: #{tpu_custom_call.1} parent=0
    _
  %s6 = ssub.s32 1, %s4
  %s7 = scalar_select 0, %s6, %s4
  %8 = sst [smem:[#allocation2]] %s2
  $region1: #{tpu_custom_call.1} parent=0
    #allocation3 [shape = 'u8[512]{0}', space=vmem, size = 0x400, scoped, tag = 'output window, operand 0, single buffered']
    #allocation4 [shape = 's32[1]{0}', space=sflag, size = 0x4, scoped, tag = 'scoped memory for tpu_custom_call.1']
    %9 = vsyncpa [#allocation4], 0
    // Predicated region
    $region2: #{tpu_custom_call.1} parent=1 // pred_check
      _
    $region3: #{tpu_custom_call.1} parent=1 // pred_check_branch
      %11 = sbr.rel (0) target = $region5
    $region4: #{tpu_custom_call.1} parent=1 // pred_region
      _
    $region5: #{tpu_custom_call.1} parent=1 // pred_fallthru
      _
    // Predicated region
    $region6: #{tpu_custom_call.1} parent=1 // pred_check
      _
    $region7: #{tpu_custom_call.1} parent=1 // pred_check_branch
      %13 = sbr.rel (0) target = $region9
    $region8: #{tpu_custom_call.1} parent=1 // pred_region
      _
    $region9: #{tpu_custom_call.1} parent=1 // pred_fallthru
      _
    // Predicated region
    $region10: #{tpu_custom_call.1} parent=1 // pred_check
      _
    $region11: #{tpu_custom_call.1} parent=1 // pred_check_branch
      %15 = sbr.rel (0) target = $region13
    $region12: #{tpu_custom_call.1} parent=1 // pred_region
      _
    $region13: #{tpu_custom_call.1} parent=1 // pred_fallthru
      _
    %v16 = vld [vmem:[%s1] sm:$0x1]
    %v17 = vld [vmem:[%s0] sm:$0xff]
    %v18 = vld [vmem:[%s0 + $0x8] sm:$0xff]
    %v19 = vld [vmem:[%s0 + $0x10] sm:$0xff]
    %v20 = vld [vmem:[%s0 + $0x18] sm:$0xff]
    %v21 = vld [vmem:[%s0 + $0x20] sm:$0xff]
    %v22 = vld [vmem:[%s0 + $0x28] sm:$0xff]
    %v23 = vld [vmem:[%s0 + $0x30] sm:$0xff]
    %v24 = vld [vmem:[%s0 + $0x38] sm:$0xff]
    %v25 = vld [vmem:[%s0 + $0x40] sm:$0xff]
    %v26 = vld [vmem:[%s0 + $0x48] sm:$0xff]
    %v27 = vld [vmem:[%s0 + $0x50] sm:$0xff]
    %v28 = vld [vmem:[%s0 + $0x58] sm:$0xff]
    %v29 = vld [vmem:[%s0 + $0x60] sm:$0xff]
    %v30 = vld [vmem:[%s0 + $0x68] sm:$0xff]
    %v31 = vld [vmem:[%s0 + $0x70] sm:$0xff]
    %v32 = vld [vmem:[%s0 + $0x78] sm:$0xff]
    %s33 = sld [smem:[#allocation2]]
    %v34 = vstv %s33
    %vm35 = vcmask 261120
    %v37 = vsel %vm35, %v16, 0
    %v40 = vsel %vm35, %v17, 0
    %v43 = vsel %vm35, %v18, 0
    %v46 = vsel %vm35, %v19, 0
    %v49 = vsel %vm35, %v20, 0
    %v52 = vsel %vm35, %v21, 0
    %v55 = vsel %vm35, %v22, 0
    %v58 = vsel %vm35, %v23, 0
    %v61 = vsel %vm35, %v24, 0
    %v64 = vsel %vm35, %v25, 0
    %v67 = vsel %vm35, %v26, 0
    %v70 = vsel %vm35, %v27, 0
    %v73 = vsel %vm35, %v28, 0
    %v76 = vsel %vm35, %v29, 0
    %v79 = vsel %vm35, %v30, 0
    %v82 = vsel %vm35, %v31, 0
    %v85 = vsel %vm35, %v32, 0
    %87 = vmatprep.subr.mxu0 0.0
    %88 = vmatpush1.xpose.msra.mxu0 %v40
    %89 = vmatprep.subr.mxu0 0.0
    %90 = vmatpush1.xpose.msra.mxu0 %v43
    %91 = vmatprep.subr.mxu0 0.0
    %92 = vmatpush1.xpose.msra.mxu0 %v46
    %93 = vmatprep.subr.mxu0 0.0
    %94 = vmatpush1.xpose.msra.mxu0 %v49
    %95 = vmatprep.subr.mxu0 0.0
    %96 = vmatpush1.xpose.msra.mxu0 %v52
    %97 = vmatprep.subr.mxu0 0.0
    %98 = vmatpush1.xpose.msra.mxu0 %v55
    %99 = vmatprep.subr.mxu0 0.0
    %100 = vmatpush1.xpose.msra.mxu0 %v58
    %101 = vmatprep.subr.mxu0 0.0
    %102 = vmatpush1.xpose.msra.mxu0 %v61
    %103 = vmatprep.subr.mxu0 0.0
    %104 = vmatpush1.xpose.msra.mxu0 %v64
    %105 = vmatprep.subr.mxu0 0.0
    %106 = vmatpush1.xpose.msra.mxu0 %v67
    %107 = vmatprep.subr.mxu0 0.0
    %108 = vmatpush1.xpose.msra.mxu0 %v70
    %109 = vmatprep.subr.mxu0 0.0
    %110 = vmatpush1.xpose.msra.mxu0 %v73
    %111 = vmatprep.subr.mxu0 0.0
    %112 = vmatpush1.xpose.msra.mxu0 %v76
    %113 = vmatprep.subr.mxu0 0.0
    %114 = vmatpush1.xpose.msra.mxu0 %v79
    %115 = vmatprep.subr.mxu0 0.0
    %116 = vmatpush1.xpose.msra.mxu0 %v82
    %117 = vmatprep.subr.mxu0 0.0
    %118 = vmatpush1.xpose.msra.mxu0 %v85
    %119 = vmatprep.subr.mxu0 0.0
    %120 = vmatpush1.xpose.msra.mxu0 0.0
    %121 = vmatprep.subr.mxu0 0.0
    %122 = vmatpush1.xpose.msra.mxu0 0.0
    %123 = vmatprep.subr.mxu0 0.0
    %124 = vmatpush1.xpose.msra.mxu0 0.0
    %125 = vmatprep.subr.mxu0 0.0
    %126 = vmatpush1.xpose.msra.mxu0 0.0
    %127 = vmatprep.subr.mxu0 0.0
    %128 = vmatpush1.xpose.msra.mxu0 0.0
    %129 = vmatprep.subr.mxu0 0.0
    %130 = vmatpush1.xpose.msra.mxu0 0.0
    %131 = vmatprep.subr.mxu0 0.0
    %132 = vmatpush1.xpose.msra.mxu0 0.0
    %133 = vmatprep.subr.mxu0 0.0
    %134 = vmatpush1.xpose.msra.mxu0 0.0
    %135 = vmatprep.subr.mxu0 0.0
    %136 = vmatpush1.xpose.msra.mxu0 0.0
    %137 = vmatprep.subr.mxu0 0.0
    %138 = vmatpush1.xpose.msra.mxu0 0.0
    %139 = vmatprep.subr.mxu0 0.0
    %140 = vmatpush1.xpose.msra.mxu0 0.0
    %141 = vmatprep.subr.mxu0 0.0
    %142 = vmatpush1.xpose.msra.mxu0 0.0
    %143 = vmatprep.subr.mxu0 0.0
    %144 = vmatpush1.xpose.msra.mxu0 0.0
    %145 = vmatprep.subr.mxu0 0.0
    %146 = vmatpush1.xpose.msra.mxu0 0.0
    %147 = vmatprep.subr.mxu0 0.0
    %148 = vmatpush1.xpose.msra.mxu0 0.0
    %149 = vmatprep.subr.mxu0 0.0
    %150 = vmatpush1.xpose.msra.mxu0 0.0
    %151 = vmatprep.mubr.f32.mxu0 0.0
    %152 = vmatmul.mubr.f32.gmra.mrb[0].mxu0 %v37
    %v153 = vpop.f32.mrb[0].mxu0
    %v154 = vadd.f32 %v34, %v153
    %v155 = vpop.f32.mrb[0].mxu0
    %156 = vdwg.mxu0
    %157 = vst [vmem:[#allocation3] sm:$0x1] %v154
    // Predicated region
    $region14: #{tpu_custom_call.1} parent=1 // pred_check
      _
    $region15: #{tpu_custom_call.1} parent=1 // pred_check_branch
      %159 = sbr.rel (0) target = $region17
    $region16: #{tpu_custom_call.1} parent=1 // pred_region
      %s161 = ssub.s32 16, 16
      %162 = vsyncadd [#allocation4], %s161
      %s164 = sshll.u32 [#allocation3], 4
      %s165 = int_to_ptr.vmem [resolvable:$true] %s164
      %167 = dma.vmem_to_hbm [thread:$0]  %s165, 16, %s3, [#allocation4]
    $region17: #{tpu_custom_call.1} parent=1 // pred_fallthru
      _
    // Predicated region
    $region18: #{tpu_custom_call.1} parent=1 // pred_check
      _
    $region19: #{tpu_custom_call.1} parent=1 // pred_check_branch
      %169 = sbr.rel (0) target = $region21
    $region20: #{tpu_custom_call.1} parent=1 // pred_region
      %170 = dma.done [#allocation4], 16
    $region21: #{tpu_custom_call.1} parent=1 // pred_fallthru
      _
    %171 = vsyncpa [#allocation4], 1

</llo_original>
